<compile_context>
chip_gen: v7x
topology: tpu7x:2x2x1
jax: 0.10.0
libtpu: 0.0.40
codegen_flags: <defaults>
</compile_context>

<pallas_src>
import functools

import jax
import jax.numpy as jnp
from jax import lax
from jax.experimental import pallas as pl
from jax.experimental.pallas import tpu as pltpu


VMEM_LIMIT = 48 * 1024 * 1024  # safe scoped-VMEM ceiling across v5e/v6e/v7x


def _tile(dim, preferred):
    """Use the preferred tile if it divides the dim, else the whole dim."""
    return preferred if dim % preferred == 0 else dim


# --------------- Kernel 1: fused input RMSNorm + QKV projection -------------

def _rms_matmul_kernel(x_ref, ln_ref, w_ref, o_ref, *, eps):
    x = x_ref[...].astype(jnp.float32)                              # [tm, H]
    var = jnp.mean(x * x, axis=-1, keepdims=True)
    xn = (x * lax.rsqrt(var + eps)
          * ln_ref[...].astype(jnp.float32)).astype(x_ref.dtype)
    o_ref[...] = jnp.dot(xn, w_ref[...],
                         preferred_element_type=jnp.float32).astype(o_ref.dtype)


def rmsnorm_matmul(x, ln_w, w, eps, *, tm=256, tn=256):
    # x: [M, H], ln_w: [H], w: [H, N]  ->  rmsnorm(x) @ w : [M, N]
    M, H = x.shape
    N = w.shape[1]
    tm = _tile(M, tm)
    tn = _tile(N, tn)
    return pl.pallas_call(
        functools.partial(_rms_matmul_kernel, eps=eps),
        out_shape=jax.ShapeDtypeStruct((M, N), x.dtype),
        grid=(M // tm, N // tn),
        in_specs=[pl.BlockSpec((tm, H), lambda i, j: (i, 0)),
                  pl.BlockSpec((1, H), lambda i, j: (0, 0)),
                  pl.BlockSpec((H, tn), lambda i, j: (0, j))],
        out_specs=pl.BlockSpec((tm, tn), lambda i, j: (i, j)),
        compiler_params=pltpu.CompilerParams(
            dimension_semantics=("parallel", "parallel"),
            vmem_limit_bytes=VMEM_LIMIT),
    )(x, ln_w.reshape(1, H), w)


# --------------- Kernel 2: flash-style causal attention ---------------------

def _flash_attn_kernel(q_ref, k_ref, v_ref, o_ref, m_sc, l_sc, acc_sc,
                       *, scale, tq, tkv):
    qi = pl.program_id(1)
    ki = pl.program_id(2)
    n_kv = pl.num_programs(2)
    q_start = qi * tq
    k_start = ki * tkv

    @pl.when(ki == 0)
    def _():
        m_sc[...] = jnp.full_like(m_sc, -1e30)
        l_sc[...] = jnp.zeros_like(l_sc)
        acc_sc[...] = jnp.zeros_like(acc_sc)

    # Skip kv tiles that lie entirely above the causal diagonal.
    @pl.when(k_start <= q_start + tq - 1)
    def _():
        q = q_ref[0]                                   # [tq, D]
        k = k_ref[0]                                   # [tkv, D]
        v = v_ref[0]                                   # [tkv, D]
        # No explicit K transpose: contract the D axes directly.
        s = lax.dot_general(q, k, (((1,), (1,)), ((), ())),
                            preferred_element_type=jnp.float32) * scale
        rows = q_start + lax.broadcasted_iota(jnp.int32, (tq, tkv), 0)
        cols = k_start + lax.broadcasted_iota(jnp.int32, (tq, tkv), 1)
        s = jnp.where(rows >= cols, s, -1e30)          # in-kernel causal mask
        m_prev = m_sc[...]
        m_new = jnp.maximum(m_prev, jnp.max(s, axis=-1, keepdims=True))
        alpha = jnp.exp(m_prev - m_new)
        p = jnp.exp(s - m_new)
        l_sc[...] = alpha * l_sc[...] + jnp.sum(p, axis=-1, keepdims=True)
        acc_sc[...] = alpha * acc_sc[...] + jnp.dot(
            p.astype(v.dtype), v, preferred_element_type=jnp.float32)
        m_sc[...] = m_new

    @pl.when(ki == n_kv - 1)
    def _():
        inv = pl.reciprocal(l_sc[...], approx=True)    # EUP, off the VALU
        o_ref[0] = (acc_sc[...] * inv).astype(o_ref.dtype)


def flash_attention(q, k, v, scale, *, tq=128, tkv=128):
    # q, k, v: [B*nH, S, D] (RoPE already applied to q, k)
    BH, S, D = q.shape
    tq = _tile(S, tq)
    tkv = _tile(S, tkv)
    kernel = functools.partial(_flash_attn_kernel, scale=scale, tq=tq, tkv=tkv)
    return pl.pallas_call(
        kernel,
        out_shape=jax.ShapeDtypeStruct((BH, S, D), q.dtype),
        grid=(BH, S // tq, S // tkv),
        in_specs=[pl.BlockSpec((1, tq, D), lambda b, i, j: (b, i, 0)),
                  pl.BlockSpec((1, tkv, D), lambda b, i, j: (b, j, 0)),
                  pl.BlockSpec((1, tkv, D), lambda b, i, j: (b, j, 0))],
        out_specs=pl.BlockSpec((1, tq, D), lambda b, i, j: (b, i, 0)),
        scratch_shapes=[pltpu.VMEM((tq, 1), jnp.float32),    # running max
                        pltpu.VMEM((tq, 1), jnp.float32),    # running denom
                        pltpu.VMEM((tq, D), jnp.float32)],   # output acc
        compiler_params=pltpu.CompilerParams(
            dimension_semantics=("parallel", "parallel", "arbitrary"),
            vmem_limit_bytes=VMEM_LIMIT),
    )(q, k, v)


# --------------- Kernel 3: O-proj fused with first residual add -------------

def _matmul_residual_kernel(x_ref, w_ref, r_ref, o_ref):
    y = jnp.dot(x_ref[...], w_ref[...], preferred_element_type=jnp.float32)
    o_ref[...] = (r_ref[...].astype(jnp.float32) + y).astype(o_ref.dtype)


def matmul_residual(x, w, residual, *, tm=256, tn=256):
    # residual + x @ w
    M, K = x.shape
    N = w.shape[1]
    tm = _tile(M, tm)
    tn = _tile(N, tn)
    return pl.pallas_call(
        _matmul_residual_kernel,
        out_shape=jax.ShapeDtypeStruct((M, N), x.dtype),
        grid=(M // tm, N // tn),
        in_specs=[pl.BlockSpec((tm, K), lambda i, j: (i, 0)),
                  pl.BlockSpec((K, tn), lambda i, j: (0, j)),
                  pl.BlockSpec((tm, tn), lambda i, j: (i, j))],
        out_specs=pl.BlockSpec((tm, tn), lambda i, j: (i, j)),
        compiler_params=pltpu.CompilerParams(
            dimension_semantics=("parallel", "parallel"),
            vmem_limit_bytes=VMEM_LIMIT),
    )(x, w, residual)


# --------------- Kernel 4: fused post-RMSNorm + MLP + residual --------------

def _rms_mlp_kernel(x_ref, ln_ref, gw_ref, uw_ref, dw_ref, o_ref,
                    xn_sc, acc_sc, *, eps):
    i = pl.program_id(1)
    n_i = pl.num_programs(1)

    @pl.when(i == 0)
    def _():
        x = x_ref[...].astype(jnp.float32)
        var = jnp.mean(x * x, axis=-1, keepdims=True)
        xn_sc[...] = (x * lax.rsqrt(var + eps)
                      * ln_ref[...].astype(jnp.float32)).astype(xn_sc.dtype)
        acc_sc[...] = x                                # residual add (f32)

    xn = xn_sc[...]
    g = jnp.dot(xn, gw_ref[...], preferred_element_type=jnp.float32)
    u = jnp.dot(xn, uw_ref[...], preferred_element_type=jnp.float32)
    h = (g * jax.nn.sigmoid(g)) * u                    # SiLU(gate) * up
    acc_sc[...] += jnp.dot(h.astype(dw_ref.dtype), dw_ref[...],
                           preferred_element_type=jnp.float32)

    @pl.when(i == n_i - 1)
    def _():
        o_ref[...] = acc_sc[...].astype(o_ref.dtype)


def rmsnorm_mlp_residual(x, ln_w, gate_w, up_w, down_w, eps, *, tm=256, ti=512):
    # x + down(SiLU(rmsnorm(x) @ gate) * (rmsnorm(x) @ up))
    M, H = x.shape
    I = gate_w.shape[1]
    tm = _tile(M, tm)
    ti = _tile(I, ti)
    return pl.pallas_call(
        functools.partial(_rms_mlp_kernel, eps=eps),
        out_shape=jax.ShapeDtypeStruct((M, H), x.dtype),
        grid=(M // tm, I // ti),
        in_specs=[pl.BlockSpec((tm, H), lambda m, i: (m, 0)),
                  pl.BlockSpec((1, H), lambda m, i: (0, 0)),
                  pl.BlockSpec((H, ti), lambda m, i: (0, i)),
                  pl.BlockSpec((H, ti), lambda m, i: (0, i)),
                  pl.BlockSpec((ti, H), lambda m, i: (i, 0))],
        out_specs=pl.BlockSpec((tm, H), lambda m, i: (m, 0)),
        scratch_shapes=[pltpu.VMEM((256 if M % 256 == 0 else M, H), x.dtype)
                        if False else pltpu.VMEM((tm, H), x.dtype),   # normed x
                        pltpu.VMEM((tm, H), jnp.float32)],            # accumulator
        compiler_params=pltpu.CompilerParams(
            dimension_semantics=("parallel", "arbitrary"),
            vmem_limit_bytes=VMEM_LIMIT),
    )(x, ln_w.reshape(1, H), gate_w, up_w, down_w)


# ------------------------------ RoPE (JAX glue) ------------------------------
# TODO(synk): fold RoPE into the attention kernel (pltpu.roll + sign mask);
# kept as a thin f32 elementwise pass here for layout safety at small head_dim.

def rope_cos_sin(position_ids, head_dim, theta=10000.0):
    inv_freq = 1.0 / (theta ** (jnp.arange(0, head_dim, 2, dtype=jnp.float32)
                                / head_dim))
    freqs = position_ids.astype(jnp.float32)[..., None] * inv_freq[None, None, :]
    emb = jnp.concatenate([freqs, freqs], axis=-1)     # [B, S, D]
    return jnp.cos(emb), jnp.sin(emb)                  # f32 for precision


def _rotate_half(x):
    x1, x2 = jnp.split(x, 2, axis=-1)
    return jnp.concatenate([-x2, x1], axis=-1)


def apply_rope(x, cos, sin):
    # x: [B, S, nH, D]; cos/sin: [B, S, D] (f32)
    xf = x.astype(jnp.float32)
    c, s = cos[:, :, None, :], sin[:, :, None, :]
    return (xf * c + _rotate_half(xf) * s).astype(x.dtype)


# --------------------- Decoder layer (Pallas-backed) ------------------------

def decoder_layer_forward(hidden_states, position_ids, params, *, num_heads, eps):
    """Returns (hidden_states, present_key_value, cos_cache, sin_cache, residual)."""
    B, S, H = hidden_states.shape
    D = H // num_heads
    M = B * S
    entry2d = hidden_states.reshape(M, H)

    # (1) fused input RMSNorm + concatenated QKV projection (one kernel).
    qkv = rmsnorm_matmul(entry2d, params["input_ln_w"], params["wqkv"], eps)
    q2d, k2d, v2d = qkv[:, :H], qkv[:, H:2 * H], qkv[:, 2 * H:]

    # RoPE (f32 angles), then head-major layout for attention / KV cache.
    cos, sin = rope_cos_sin(position_ids, D)
    qh = apply_rope(q2d.reshape(B, S, num_heads, D), cos, sin).transpose(0, 2, 1, 3)
    kh = apply_rope(k2d.reshape(B, S, num_heads, D), cos, sin).transpose(0, 2, 1, 3)
    vh = v2d.reshape(B, S, num_heads, D).transpose(0, 2, 1, 3)

    # (2) flash-style causal attention.
    scale = 1.0 / (D ** 0.5)
    attn = flash_attention(qh.reshape(B * num_heads, S, D),
                           kh.reshape(B * num_heads, S, D),
                           vh.reshape(B * num_heads, S, D), scale)
    attn2d = attn.reshape(B, num_heads, S, D).transpose(0, 2, 1, 3).reshape(M, H)

    # (3) O-proj fused with first residual add.
    hidden = matmul_residual(attn2d, params["o_w"], entry2d)

    # (4) fused post-attention RMSNorm + MLP + second residual add.
    out = rmsnorm_mlp_residual(hidden, params["post_ln_w"], params["gate_w"],
                               params["up_w"], params["down_w"], eps)

    present_key_value = (kh, vh)   # post-RoPE K, V : [B, nH, S, D]
    # TODO(synk): tensor-parallel sharding / quantized-MLP / KV-cache token-gen
    # paths are out of scope (single-device prefill semantics, tp_degree=1).
    return out.reshape(B, S, H), present_key_value, cos, sin, None


# --------------------------- Pure-JAX reference ------------------------------

def reference_forward(hidden_states, position_ids, params, *, num_heads, eps):
    B, S, H = hidden_states.shape
    D = H // num_heads

    def rms(x, w):
        xf = x.astype(jnp.float32)
        var = jnp.mean(xf * xf, axis=-1, keepdims=True)
        return (xf * lax.rsqrt(var + eps) * w).astype(x.dtype)

    entry = hidden_states
    normed = rms(hidden_states, params["input_ln_w"])
    q = (normed @ params["q_w"]).reshape(B, S, num_heads, D).transpose(0, 2, 1, 3)
    k = (normed @ params["k_w"]).reshape(B, S, num_heads, D).transpose(0, 2, 1, 3)
    v = (normed @ params["v_w"]).reshape(B, S, num_heads, D).transpose(0, 2, 1, 3)

    cos, sin = rope_cos_sin(position_ids, D)
    cb, sb = cos[:, None], sin[:, None]
    qf, kf = q.astype(jnp.float32), k.astype(jnp.float32)
    q = (qf * cb + _rotate_half(qf) * sb).astype(hidden_states.dtype)
    k = (kf * cb + _rotate_half(kf) * sb).astype(hidden_states.dtype)

    s = jnp.einsum("bhqd,bhkd->bhqk", q, k).astype(jnp.float32) / (D ** 0.5)
    causal = jnp.where(jnp.arange(S)[:, None] >= jnp.arange(S)[None, :], 0.0, -1e9)
    s = s + causal[None, None]
    p = jax.nn.softmax(s, axis=-1).astype(hidden_states.dtype)
    attn = jnp.einsum("bhqk,bhkd->bhqd", p, v).transpose(0, 2, 1, 3).reshape(B, S, H)

    hidden = entry + attn @ params["o_w"]
    residual2 = hidden
    normed2 = rms(hidden, params["post_ln_w"])
    g = normed2 @ params["gate_w"]
    u = normed2 @ params["up_w"]
    mlp = (jax.nn.silu(g) * u) @ params["down_w"]
    return residual2 + mlp


# ----------------------------------- main ------------------------------------

if __name__ == "__main__":
    # Small llama-like config: hidden=32, 4 heads (head_dim=8), intermediate=64.
    B, S, H, NH, I = 2, 8, 32, 4, 64
    EPS = 1e-5
    dtype = jnp.float32

    key = jax.random.PRNGKey(0)
    ks = jax.random.split(key, 10)
    wscale = 0.05
    params = {
        "input_ln_w": 1.0 + 0.1 * jax.random.normal(ks[0], (H,), dtype),
        "post_ln_w":  1.0 + 0.1 * jax.random.normal(ks[1], (H,), dtype),
        "q_w":    wscale * jax.random.normal(ks[2], (H, H), dtype),
        "k_w":    wscale * jax.random.normal(ks[3], (H, H), dtype),
        "v_w":    wscale * jax.random.normal(ks[4], (H, H), dtype),
        "o_w":    wscale * jax.random.normal(ks[5], (H, H), dtype),
        "gate_w": wscale * jax.random.normal(ks[6], (H, I), dtype),
        "up_w":   wscale * jax.random.normal(ks[7], (H, I), dtype),
        "down_w": wscale * jax.random.normal(ks[8], (I, H), dtype),
    }
    # Fused QKV weight for the Pallas path.
    params["wqkv"] = jnp.concatenate(
        [params["q_w"], params["k_w"], params["v_w"]], axis=1)   # [H, 3H]

    hidden_states = jax.random.normal(ks[9], (B, S, H), dtype)
    position_ids = jnp.broadcast_to(jnp.arange(S)[None, :], (B, S))

    out, present_kv, cos_cache, sin_cache, residual = decoder_layer_forward(
        hidden_states, position_ids, params, num_heads=NH, eps=EPS)
    out = jax.block_until_ready(out)
    jax.block_until_ready(present_kv)

    ref = reference_forward(hidden_states, position_ids, params,
                            num_heads=NH, eps=EPS)
    assert out.shape == (B, S, H)
    # Tolerance accounts for the approximate (EUP) reciprocal in the softmax.
    assert jnp.allclose(out, ref, atol=2e-3, rtol=2e-3), \
        f"mismatch: max abs diff {jnp.max(jnp.abs(out - ref))}"

    print("KERNEL_OK")
</pallas_src>

<mosaic_0001>
module attributes {stable_mosaic.version = 11 : i64} {
  func.func @_rms_matmul_kernel(%arg0: i32, %arg1: i32, %arg2: memref<16x32xf32, #tpu.memory_space<vmem>>, %arg3: memref<1x32xf32, #tpu.memory_space<vmem>>, %arg4: memref<32x96xf32, #tpu.memory_space<vmem>>, %arg5: memref<16x96xf32, #tpu.memory_space<vmem>>) attributes {dimension_semantics = [#tpu.dimension_semantics<parallel>, #tpu.dimension_semantics<parallel>], iteration_bounds = array<i64: 1, 1>, scalar_prefetch = 0 : i64, scratch_operands = 0 : i64, tpu.core_type = #tpu.core_type<tc>, window_params = [{transform_indices = @transform_0, window_bounds = array<i64: 16, 32>}, {pipeline_mode = #tpu.pipeline_mode<synchronous>, transform_indices = @transform_1, window_bounds = array<i64: 1, 32>}, {transform_indices = @transform_2, window_bounds = array<i64: 32, 96>}, {transform_indices = @transform_3, window_bounds = array<i64: 16, 96>}]} {
    %c0 = arith.constant 0 : index
    %c0_0 = arith.constant 0 : index
    %0 = vector.load %arg2[%c0, %c0_0] : memref<16x32xf32, #tpu.memory_space<vmem>>, vector<16x32xf32>
    %1 = arith.mulf %0, %0 : vector<16x32xf32>
    %cst = arith.constant dense<0.000000e+00> : vector<16xf32>
    %2 = vector.multi_reduction <add>, %1, %cst [1] : vector<16x32xf32> to vector<16xf32>
    %3 = vector.shape_cast %2 : vector<16xf32> to vector<16x1xf32>
    %cst_1 = arith.constant 3.200000e+01 : f32
    %4 = vector.broadcast %cst_1 : f32 to vector<16x1xf32>
    %5 = arith.divf %3, %4 : vector<16x1xf32>
    %cst_2 = arith.constant 9.99999974E-6 : f32
    %6 = vector.broadcast %cst_2 : f32 to vector<16x1xf32>
    %7 = arith.addf %5, %6 : vector<16x1xf32>
    %8 = math.rsqrt %7 : vector<16x1xf32>
    %9 = vector.broadcast %8 : vector<16x1xf32> to vector<16x32xf32>
    %10 = arith.mulf %0, %9 : vector<16x32xf32>
    %c0_3 = arith.constant 0 : index
    %c0_4 = arith.constant 0 : index
    %11 = vector.load %arg3[%c0_3, %c0_4] : memref<1x32xf32, #tpu.memory_space<vmem>>, vector<1x32xf32>
    %12 = vector.broadcast %11 : vector<1x32xf32> to vector<16x32xf32>
    %13 = arith.mulf %10, %12 : vector<16x32xf32>
    %c0_5 = arith.constant 0 : index
    %c0_6 = arith.constant 0 : index
    %14 = vector.load %arg4[%c0_5, %c0_6] : memref<32x96xf32, #tpu.memory_space<vmem>>, vector<32x96xf32>
    %cst_7 = arith.constant dense<0.000000e+00> : vector<16x96xf32>
    %15 = tpu.matmul %13, %14, %cst_7 {dimension_numbers = #tpu.dot_dimension_numbers<[1], [0], [0], [1], [0, 0, 1, 1], [], []>} : vector<16x32xf32>, vector<32x96xf32>, vector<16x96xf32> -> vector<16x96xf32>
    %c0_8 = arith.constant 0 : index
    %c0_9 = arith.constant 0 : index
    %16 = vector.load %arg5[%c0_8, %c0_9] : memref<16x96xf32, #tpu.memory_space<vmem>>, vector<16x96xf32>
    tpu.vector_store %arg5[%c0_8, %c0_9], %15 {strides = array<i32>} : memref<16x96xf32, #tpu.memory_space<vmem>>, vector<16x96xf32>,
    return
  }
  func.func @transform_0(%arg0: i32, %arg1: i32) -> (i32, i32) {
    %c0_i32 = arith.constant 0 : i32
    %c0_i32_0 = arith.constant 0 : i32
    return %arg0, %c0_i32 : i32, i32
  }
  func.func @transform_1(%arg0: i32, %arg1: i32) -> (i32, i32) {
    %c0_i32 = arith.constant 0 : i32
    %c0_i32_0 = arith.constant 0 : i32
    %c0_i32_1 = arith.constant 0 : i32
    return %c0_i32, %c0_i32_0 : i32, i32
  }
  func.func @transform_2(%arg0: i32, %arg1: i32) -> (i32, i32) {
    %c0_i32 = arith.constant 0 : i32
    %c0_i32_0 = arith.constant 0 : i32
    return %c0_i32, %arg1 : i32, i32
  }
  func.func @transform_3(%arg0: i32, %arg1: i32) -> (i32, i32) {
    %c0_i32 = arith.constant 0 : i32
    return %arg0, %arg1 : i32, i32
  }
}

</mosaic_0001>

<llo_original>
// kernel: tpu_custom_call.1
$region0: #{tpu_custom_call.1}
  #allocation0 [shape = 'u32[]', space=smem, size = 0x4, offset = 0x4, fixed_abs, tag = 'smem constant byte address 0x4 - core index']
  #allocation1 [shape = 'u32[144,128]{1,0:T(1,128)}', space=vmem, size = 0x12000, scoped, tag = 'internal scratch']
  %s0 = inlined_call_operand.hbm [shape: f32[16,32], index: 0, kind: input, shape index: {}]
  %s1 = inlined_call_operand.vmem [shape: f32[1,32], index: 1, kind: input, shape index: {}]
  %s2 = inlined_call_operand.hbm [shape: f32[32,96], index: 2, kind: input, shape index: {}]
  %s3 = inlined_call_operand.hbm [shape: f32[16,96], index: 3, kind: output, shape index: {}]
  %s4 = sld [smem:[#allocation0]]
  $region30: #{tpu_custom_call.1} parent=0
    _
  %s6 = ssub.s32 1, %s4
  %s7 = scalar_select 0, %s6, %s4
  $region1: #{tpu_custom_call.1} parent=0
    #allocation2 [shape = 'u8[8192]{0}', space=vmem, size = 0x2000, scoped, tag = 'input window, operand 0, single buffered']
    #allocation3 [shape = 's32[1]{0}', space=sflag, size = 0x4, scoped, tag = 'scoped memory for tpu_custom_call.1']
    #allocation4 [shape = 's32[1]{0}', space=sflag, size = 0x4, scoped, tag = 'scoped memory for tpu_custom_call.1']
    #allocation5 [shape = 'u8[16384]{0}', space=vmem, size = 0x4000, scoped, tag = 'input window, operand 2, single buffered']
    #allocation6 [shape = 's32[1]{0}', space=sflag, size = 0x4, scoped, tag = 'scoped memory for tpu_custom_call.1']
    #allocation7 [shape = 'u8[8192]{0}', space=vmem, size = 0x2000, scoped, tag = 'output window, operand 0, single buffered']
    %8 = vsyncpa [#allocation3], 0
    %9 = vsyncpa [#allocation6], 0
    %10 = vsyncpa [#allocation4], 0
    // Predicated region
    $region2: #{tpu_custom_call.1} parent=1 // pred_check
      _
    $region3: #{tpu_custom_call.1} parent=1 // pred_check_branch
      %12 = sbr.rel (0) target = $region5
    $region4: #{tpu_custom_call.1} parent=1 // pred_region
      %s14 = ssub.s32 256, 256
      %15 = vsyncadd [#allocation3], %s14
      %s16 = sshll.u32 [#allocation2], 4
      %s17 = int_to_ptr.vmem [resolvable:$true] %s16
      %22 = dma.hbm_to_vmem [thread:$0]  %s0, 256, %s17, [#allocation3], 128, 128, 8
    $region5: #{tpu_custom_call.1} parent=1 // pred_fallthru
      _
    // Predicated region
    $region6: #{tpu_custom_call.1} parent=1 // pred_check
      _
    $region7: #{tpu_custom_call.1} parent=1 // pred_check_branch
      %24 = sbr.rel (0) target = $region9
    $region8: #{tpu_custom_call.1} parent=1 // pred_region
      _
    $region9: #{tpu_custom_call.1} parent=1 // pred_fallthru
      _
    // Predicated region
    $region10: #{tpu_custom_call.1} parent=1 // pred_check
      _
    $region11: #{tpu_custom_call.1} parent=1 // pred_check_branch
      %26 = sbr.rel (0) target = $region13
    $region12: #{tpu_custom_call.1} parent=1 // pred_region
      %s28 = ssub.s32 512, 512
      %29 = vsyncadd [#allocation6], %s28
      %s30 = sshll.u32 [#allocation5], 4
      %s31 = int_to_ptr.vmem [resolvable:$true] %s30
      %36 = dma.hbm_to_vmem [thread:$0]  %s2, 512, %s31, [#allocation6], 128, 128, 8
    $region13: #{tpu_custom_call.1} parent=1 // pred_fallthru
      _
    // Predicated region
    $region14: #{tpu_custom_call.1} parent=1 // pred_check
      _
    $region15: #{tpu_custom_call.1} parent=1 // pred_check_branch
      %38 = sbr.rel (0) target = $region17
    $region16: #{tpu_custom_call.1} parent=1 // pred_region
      %39 = dma.done [#allocation3], 256
    $region17: #{tpu_custom_call.1} parent=1 // pred_fallthru
      _
    // Predicated region
    $region18: #{tpu_custom_call.1} parent=1 // pred_check
      _
    $region19: #{tpu_custom_call.1} parent=1 // pred_check_branch
      %41 = sbr.rel (0) target = $region21
    $region20: #{tpu_custom_call.1} parent=1 // pred_region
      %42 = dma.done [#allocation6], 512
    $region21: #{tpu_custom_call.1} parent=1 // pred_fallthru
      _
    %v43 = vld [vmem:[#allocation2] sm:$0xff]
    %v44 = vld [vmem:[#allocation2 + $0x8] sm:$0xff]
    %v45 = vmul.f32 %v43, %v43
    %v46 = vmul.f32 %v44, %v44
    %vm47 = vcmask 261120
    %v48 = vsel %vm47, %v45, 0.0
    %49 = vadd.xlane.f32.xlu0 %v48
    %v50 = vpop.xlane.xlu0 %49
    %v51 = vsel %vm47, %v46, 0.0
    %52 = vadd.xlane.f32.xlu0 %v51
    %v53 = vpop.xlane.xlu0 %52
    %v54 = vrcp.pop 32.0
    %v55 = vmul.f32 %v50, %v54
    %v56 = vmul.f32 %v53, %v54
    %v57 = vadd.f32 %v55, 1e-05
    %v58 = vadd.f32 %v56, 1e-05
    %v59 = vrsqrt.pop %v57
    %v60 = vrsqrt.pop %v58
    %v61 = vmul.f32 %v43, %v59
    %v62 = vmul.f32 %v44, %v60
    %v63 = vld [vmem:[%s1] sm:$0x1]
    %v65 = vlaneseq
    %v66 = vshrl.u32 %v65, 7
    %v67 = vsub.s32 0, %v66
    %v68 = vrot.slane %v63, %v67
    %v70 = vmul.f32 %v61, %v68
    %v71 = vmul.f32 %v62, %v68
    %v72 = vld [vmem:[#allocation5] sm:$0xff]
    %v73 = vld [vmem:[#allocation5 + $0x8] sm:$0xff]
    %v74 = vld [vmem:[#allocation5 + $0x10] sm:$0xff]
    %v75 = vld [vmem:[#allocation5 + $0x18] sm:$0xff]
    %v77 = vsel %vm47, %v70, 0
    %v80 = vsel %vm47, %v71, 0
    %82 = vmatprep.subr.mxu0 0.0
    %83 = vmatpush1.msra.mxu0 %v72
    %84 = vmatprep.subr.mxu0 0.0
    %85 = vmatpush1.msra.mxu0 %v73
    %86 = vmatprep.subr.mxu0 0.0
    %87 = vmatpush1.msra.mxu0 %v74
    %88 = vmatprep.subr.mxu0 0.0
    %89 = vmatpush1.msra.mxu0 %v75
    %90 = vmatprep.subr.mxu0 0.0
    %91 = vmatpush1.msra.mxu0 0.0
    %92 = vmatprep.subr.mxu0 0.0
    %93 = vmatpush1.msra.mxu0 0.0
    %94 = vmatprep.subr.mxu0 0.0
    %95 = vmatpush1.msra.mxu0 0.0
    %96 = vmatprep.subr.mxu0 0.0
    %97 = vmatpush1.msra.mxu0 0.0
    %98 = vmatprep.subr.mxu0 0.0
    %99 = vmatpush1.msra.mxu0 0.0
    %100 = vmatprep.subr.mxu0 0.0
    %101 = vmatpush1.msra.mxu0 0.0
    %102 = vmatprep.subr.mxu0 0.0
    %103 = vmatpush1.msra.mxu0 0.0
    %104 = vmatprep.subr.mxu0 0.0
    %105 = vmatpush1.msra.mxu0 0.0
    %106 = vmatprep.subr.mxu0 0.0
    %107 = vmatpush1.msra.mxu0 0.0
    %108 = vmatprep.subr.mxu0 0.0
    %109 = vmatpush1.msra.mxu0 0.0
    %110 = vmatprep.subr.mxu0 0.0
    %111 = vmatpush1.msra.mxu0 0.0
    %112 = vmatprep.subr.mxu0 0.0
    %113 = vmatpush1.msra.mxu0 0.0
    %114 = vmatprep.subr.mxu0 0.0
    %115 = vmatpush1.msra.mxu0 0.0
    %116 = vmatprep.subr.mxu0 0.0
    %117 = vmatpush1.msra.mxu0 0.0
    %118 = vmatprep.subr.mxu0 0.0
    %119 = vmatpush1.msra.mxu0 0.0
    %120 = vmatprep.subr.mxu0 0.0
    %121 = vmatpush1.msra.mxu0 0.0
    %122 = vmatprep.subr.mxu0 0.0
    %123 = vmatpush1.msra.mxu0 0.0
    %124 = vmatprep.subr.mxu0 0.0
    %125 = vmatpush1.msra.mxu0 0.0
    %126 = vmatprep.subr.mxu0 0.0
    %127 = vmatpush1.msra.mxu0 0.0
    %128 = vmatprep.subr.mxu0 0.0
    %129 = vmatpush1.msra.mxu0 0.0
    %130 = vmatprep.subr.mxu0 0.0
    %131 = vmatpush1.msra.mxu0 0.0
    %132 = vmatprep.subr.mxu0 0.0
    %133 = vmatpush1.msra.mxu0 0.0
    %134 = vmatprep.subr.mxu0 0.0
    %135 = vmatpush1.msra.mxu0 0.0
    %136 = vmatprep.subr.mxu0 0.0
    %137 = vmatpush1.msra.mxu0 0.0
    %138 = vmatprep.subr.mxu0 0.0
    %139 = vmatpush1.msra.mxu0 0.0
    %140 = vmatprep.subr.mxu0 0.0
    %141 = vmatpush1.msra.mxu0 0.0
    %142 = vmatprep.subr.mxu0 0.0
    %143 = vmatpush1.msra.mxu0 0.0
    %144 = vmatprep.subr.mxu0 0.0
    %145 = vmatpush1.msra.mxu0 0.0
    %146 = vmatprep.mubr.f32.mxu0 0.0
    %147 = vmatmul.mubr.f32.gmra.mrb[0].mxu0 %v77
    %v148 = vpop.f32.mrb[0].mxu0
    %v149 = vadd.f32 0.0, %v148
    %v150 = vpop.f32.mrb[0].mxu0
    %151 = vmatprep.mubr.f32.mxu0 0.0
    %152 = vmatmul.mubr.f32.gmra.mrb[0].mxu0 %v80
    %v153 = vpop.f32.mrb[0].mxu0
    %v154 = vadd.f32 0.0, %v153
    %v155 = vpop.f32.mrb[0].mxu0
    %156 = vdwg.mxu0
    %vm157 = vcmask 785408
    %158 = vst.msk [vmem:[#allocation7] sm:$0xff] %vm157, %v149
    %159 = vst.msk [vmem:[#allocation7 + $0x8] sm:$0xff] %vm157, %v154
    // Predicated region
    $region22: #{tpu_custom_call.1} parent=1 // pred_check
      _
    $region23: #{tpu_custom_call.1} parent=1 // pred_check_branch
      %161 = sbr.rel (0) target = $region25
    $region24: #{tpu_custom_call.1} parent=1 // pred_region
      %s163 = ssub.s32 256, 256
      %164 = vsyncadd [#allocation4], %s163
      %s165 = sshll.u32 [#allocation7], 4
      %s166 = int_to_ptr.vmem [resolvable:$true] %s165
      %171 = dma.vmem_to_hbm [thread:$0]  %s166, 256, %s3, [#allocation4], 128, 128, 8
    $region25: #{tpu_custom_call.1} parent=1 // pred_fallthru
      _
    // Predicated region
    $region26: #{tpu_custom_call.1} parent=1 // pred_check
      _
    $region27: #{tpu_custom_call.1} parent=1 // pred_check_branch
      %173 = sbr.rel (0) target = $region29
    $region28: #{tpu_custom_call.1} parent=1 // pred_region
      %174 = dma.done [#allocation4], 256
    $region29: #{tpu_custom_call.1} parent=1 // pred_fallthru
      _
    %175 = vsyncpa [#allocation3], 1
    %176 = vsyncpa [#allocation6], 1
    %177 = vsyncpa [#allocation4], 1

</llo_original>
